<compile_context>
chip_gen: v5e
topology: v5e:2x2
jax: 0.10.0
libtpu: 0.0.40
codegen_flags: <defaults>
</compile_context>

<pallas_src>
import jax
import jax.numpy as jnp
from jax.experimental import pallas as pl
from jax.experimental.pallas import tpu as pltpu


def _round_up(x, m):
    return ((x + m - 1) // m) * m


def _fh_kernel_resident(x_ref, w_ref, b_ref, o_ref):
    # x_ref: [tm, nfp]   rows of the flattened input
    # w_ref: [nfp, Tp]   pre-transposed weight, VMEM-resident (constant index_map)
    # b_ref: [1,  Tp]
    # o_ref: [tm, Tp]
    acc = jnp.dot(x_ref[...], w_ref[...], preferred_element_type=jnp.float32)
    o_ref[...] = (acc + b_ref[...].astype(jnp.float32)).astype(o_ref.dtype)
    # TODO(synk): dropout with head_dropout > 0 at train time is omitted (default p=0
    # => identity; eval-mode dropout is identity regardless).


def _fh_kernel_ktiled(x_ref, w_ref, b_ref, o_ref, acc_ref):
    # Fallback when the full weight does not fit the VMEM budget.
    # x_ref: [tm, tk], w_ref: [tk, Tp], b_ref: [1, Tp], o_ref/acc_ref: [tm, Tp]
    k = pl.program_id(1)

    @pl.when(k == 0)
    def _():
        acc_ref[...] = jnp.zeros_like(acc_ref)

    acc_ref[...] += jnp.dot(x_ref[...], w_ref[...], preferred_element_type=jnp.float32)

    @pl.when(k == pl.num_programs(1) - 1)
    def _():
        o_ref[...] = (acc_ref[...] + b_ref[...].astype(jnp.float32)).astype(o_ref.dtype)


def _vmem_bytes(tm, tk, Tp, x_item, w_item, out_item, with_acc):
    # Conservative: count double-buffering on every BlockSpec operand.
    x_buf = 2 * tm * tk * x_item
    w_buf = 2 * tk * Tp * w_item
    b_buf = 2 * Tp * 4
    o_buf = 2 * tm * Tp * out_item
    acc = tm * Tp * 4 if with_acc else 0
    return x_buf + w_buf + b_buf + o_buf + acc


def _k_tile_candidates(nfp, tk_max):
    # Divisors of nfp that are multiples of 128 (nfp is always a 128 multiple here),
    # largest first.
    q = nfp // 128
    cands = [128 * d for d in range(1, q + 1) if q % d == 0 and 128 * d <= tk_max]
    if not cands:
        cands = [128]
    return sorted(cands, reverse=True)


def flatten_head(x, weight, bias, *, tm_max=512, tk_max=4096, compute_dtype=None,
                 vmem_budget_bytes=40 * 1024 * 1024,
                 vmem_limit_bytes=48 * 1024 * 1024):
    """FlattenHead forward: flatten(-2) -> Linear(nf, target_window) -> dropout(p=0).

    x:      [B, n_vars, d_model, patch_num]
    weight: [target_window, nf]   (PyTorch nn.Linear layout)
    bias:   [target_window]
    compute_dtype: optional (e.g. jnp.bfloat16) for the matmul operands; accumulation
                   stays f32 and the output keeps x.dtype. Left None by default so
                   numerics match the f32 PyTorch module exactly.
    vmem_budget_bytes: planning budget (kept <= v7x's 64 MiB physical VMEM per TC;
                       raise to ~96 MiB on v5e/v6e to hold larger resident weights).
    returns [B, n_vars, target_window]
    """
    B, n_vars, d_model, patch_num = x.shape
    nf = d_model * patch_num
    T, nf_w = weight.shape
    assert nf_w == nf

    M = B * n_vars
    out_dtype = x.dtype
    x2d = x.reshape(M, nf)

    # One-time transpose of the (small, heavily reused) weight to [nf, T]: the kernel
    # then does a plain row-major contraction with no per-tile transpose.
    wT = weight.T
    if compute_dtype is not None:
        x2d = x2d.astype(compute_dtype)
        wT = wT.astype(compute_dtype)

    # Lane-dense output: pad target_window up to a 128 multiple (weight/bias only;
    # they are tiny). Output columns T..Tp are sliced off afterwards.
    Tp = _round_up(T, 128)
    b2d = bias.reshape(1, T)
    if Tp != T:
        wT = jnp.pad(wT, ((0, 0), (0, Tp - T)))
        b2d = jnp.pad(b2d, ((0, 0), (0, Tp - T)))

    # K (nf) axis: only pad when nf is not a 128 multiple (correctness-critical for the
    # reduction). Typical nf = d_model * patch_num is already 128-aligned, so x is NOT
    # copied by a wrapper pad in the common case.
    if nf % 128 == 0:
        nfp = nf
    else:
        nfp = _round_up(nf, 128)
        x2d = jnp.pad(x2d, ((0, 0), (0, nfp - nf)))
        wT = jnp.pad(wT, ((0, nfp - nf), (0, 0)))

    # M tile: multiple of 8 (or the full ragged M). No M padding: out-of-range rows of
    # the last block are masked on store.
    if M % 8 == 0:
        tm = min(tm_max, M)
        # Give the v7x megacore at least two parallel M blocks when M allows it.
        if pl.cdiv(M, tm) == 1 and M >= 16:
            tm = _round_up(pl.cdiv(M, 2), 8)
    else:
        tm = M  # block dim equals the full array dim (allowed), single M block

    x_item = jnp.dtype(x2d.dtype).itemsize
    w_item = jnp.dtype(wT.dtype).itemsize
    out_item = jnp.dtype(out_dtype).itemsize

    m_blocks = pl.cdiv(M, tm)
    flops = 2 * M * nfp * Tp

    # ------------------------------------------------------------------ plan A:
    # full weight resident in VMEM, 1-D grid over M, no accumulator scratch.
    if _vmem_bytes(tm, nfp, Tp, x_item, w_item, out_item, False) <= vmem_budget_bytes:
        bytes_accessed = M * nfp * x_item + nfp * Tp * w_item + M * Tp * out_item
        out2d = pl.pallas_call(
            _fh_kernel_resident,
            out_shape=jax.ShapeDtypeStruct((M, Tp), out_dtype),
            grid_spec=pltpu.PrefetchScalarGridSpec(
                num_scalar_prefetch=0,
                grid=(m_blocks,),
                in_specs=[
                    pl.BlockSpec((tm, nfp), lambda i: (i, 0)),
                    pl.BlockSpec((nfp, Tp), lambda i: (0, 0)),   # constant -> fetched once
                    pl.BlockSpec((1, Tp), lambda i: (0, 0)),
                ],
                out_specs=pl.BlockSpec((tm, Tp), lambda i: (i, 0)),
            ),
            compiler_params=pltpu.CompilerParams(
                dimension_semantics=("parallel",),
                vmem_limit_bytes=vmem_limit_bytes,
            ),
            cost_estimate=pl.CostEstimate(
                flops=flops, transcendentals=0, bytes_accessed=bytes_accessed),
        )(x2d, wT, b2d)
    # ------------------------------------------------------------------ plan B:
    # K-tiled with f32 accumulator; K axis last / "arbitrary". Used when the full
    # weight would overflow the VMEM budget (e.g. big nf*T on v7x's 64 MiB VMEM).
    else:
        cands = _k_tile_candidates(nfp, tk_max)
        tk = cands[-1]
        for cand in cands:
            if _vmem_bytes(tm, cand, Tp, x_item, w_item, out_item, True) <= vmem_budget_bytes:
                tk = cand
                break
        # If even the smallest tk is tight, shrink the M tile (never below 8 / full M).
        while (tm > 8 and tm % 8 == 0 and
               _vmem_bytes(tm, tk, Tp, x_item, w_item, out_item, True) > vmem_budget_bytes):
            tm = max(8, _round_up(tm // 2, 8))
        m_blocks = pl.cdiv(M, tm)
        k_blocks = nfp // tk
        bytes_accessed = (M * nfp * x_item + m_blocks * nfp * Tp * w_item
                          + M * Tp * out_item)
        out2d = pl.pallas_call(
            _fh_kernel_ktiled,
            out_shape=jax.ShapeDtypeStruct((M, Tp), out_dtype),
            grid_spec=pltpu.PrefetchScalarGridSpec(
                num_scalar_prefetch=0,
                grid=(m_blocks, k_blocks),
                in_specs=[
                    pl.BlockSpec((tm, tk), lambda i, k: (i, k)),
                    pl.BlockSpec((tk, Tp), lambda i, k: (k, 0)),
                    pl.BlockSpec((1, Tp), lambda i, k: (0, 0)),
                ],
                out_specs=pl.BlockSpec((tm, Tp), lambda i, k: (i, 0)),
                scratch_shapes=[pltpu.VMEM((tm, Tp), jnp.float32)],
            ),
            compiler_params=pltpu.CompilerParams(
                dimension_semantics=("parallel", "arbitrary"),
                vmem_limit_bytes=vmem_limit_bytes,
            ),
            cost_estimate=pl.CostEstimate(
                flops=flops, transcendentals=0, bytes_accessed=bytes_accessed),
        )(x2d, wT, b2d)

    if Tp != T:
        out2d = out2d[:, :T]
    return out2d.reshape(B, n_vars, T)


if __name__ == "__main__":
    # Small shapes consistent with the module's forward:
    # x: [bs, n_vars, d_model, patch_num], nf = d_model * patch_num.
    B, n_vars, d_model, patch_num = 2, 4, 16, 8
    nf = d_model * patch_num          # 128
    target_window = 96

    key = jax.random.PRNGKey(0)
    kx, kw, kb = jax.random.split(key, 3)

    x = jax.random.normal(kx, (B, n_vars, d_model, patch_num), dtype=jnp.float32)

    # Deterministic nn.Linear-style init: U(-1/sqrt(nf), 1/sqrt(nf))
    bound = 1.0 / jnp.sqrt(jnp.float32(nf))
    weight = jax.random.uniform(kw, (target_window, nf), jnp.float32, -bound, bound)
    bias = jax.random.uniform(kb, (target_window,), jnp.float32, -bound, bound)

    # Reference (same semantics as the PyTorch forward with p=0 dropout).
    ref = x.reshape(B, n_vars, nf) @ weight.T + bias

    # Plan A: resident-weight, 1-D grid over M.
    out_a = jax.block_until_ready(flatten_head(x, weight, bias))
    assert out_a.shape == (B, n_vars, target_window)
    assert jnp.allclose(out_a, ref, atol=1e-5, rtol=1e-5)

    # Plan B: force the K-tiled fallback path (tiny VMEM budget) and check it too.
    out_b = jax.block_until_ready(flatten_head(x, weight, bias, vmem_budget_bytes=1))
    assert out_b.shape == (B, n_vars, target_window)
    assert jnp.allclose(out_b, ref, atol=1e-5, rtol=1e-5)

    print("KERNEL_OK")
</pallas_src>

<mosaic_0001>
module attributes {stable_mosaic.version = 11 : i64} {
  func.func @_fh_kernel_resident(%arg0: i32, %arg1: memref<8x128xf32, #tpu.memory_space<vmem>>, %arg2: memref<128x128xf32, #tpu.memory_space<vmem>>, %arg3: memref<1x128xf32, #tpu.memory_space<vmem>>, %arg4: memref<8x128xf32, #tpu.memory_space<vmem>>) attributes {dimension_semantics = [#tpu.dimension_semantics<parallel>], iteration_bounds = array<i64: 1>, scalar_prefetch = 0 : i64, scratch_operands = 0 : i64, tpu.core_type = #tpu.core_type<tc>, window_params = [{transform_indices = @transform_0, window_bounds = array<i64: 8, 128>}, {pipeline_mode = #tpu.pipeline_mode<synchronous>, transform_indices = @transform_1, window_bounds = array<i64: 128, 128>}, {pipeline_mode = #tpu.pipeline_mode<synchronous>, transform_indices = @transform_2, window_bounds = array<i64: 1, 128>}, {transform_indices = @transform_3, window_bounds = array<i64: 8, 128>}]} {
    %c0 = arith.constant 0 : index
    %c0_0 = arith.constant 0 : index
    %0 = vector.load %arg1[%c0, %c0_0] : memref<8x128xf32, #tpu.memory_space<vmem>>, vector<8x128xf32>
    %c0_1 = arith.constant 0 : index
    %c0_2 = arith.constant 0 : index
    %1 = vector.load %arg2[%c0_1, %c0_2] : memref<128x128xf32, #tpu.memory_space<vmem>>, vector<128x128xf32>
    %cst = arith.constant dense<0.000000e+00> : vector<8x128xf32>
    %2 = tpu.matmul %0, %1, %cst {dimension_numbers = #tpu.dot_dimension_numbers<[1], [0], [0], [1], [0, 0, 1, 1], [], []>} : vector<8x128xf32>, vector<128x128xf32>, vector<8x128xf32> -> vector<8x128xf32>
    %c0_3 = arith.constant 0 : index
    %c0_4 = arith.constant 0 : index
    %3 = vector.load %arg3[%c0_3, %c0_4] : memref<1x128xf32, #tpu.memory_space<vmem>>, vector<1x128xf32>
    %4 = vector.broadcast %3 : vector<1x128xf32> to vector<8x128xf32>
    %5 = arith.addf %2, %4 : vector<8x128xf32>
    %c0_5 = arith.constant 0 : index
    %c0_6 = arith.constant 0 : index
    %6 = vector.load %arg4[%c0_5, %c0_6] : memref<8x128xf32, #tpu.memory_space<vmem>>, vector<8x128xf32>
    tpu.vector_store %arg4[%c0_5, %c0_6], %5 {strides = array<i32>} : memref<8x128xf32, #tpu.memory_space<vmem>>, vector<8x128xf32>,
    return
  }
  func.func @transform_0(%arg0: i32) -> (i32, i32) {
    %c0_i32 = arith.constant 0 : i32
    %c0_i32_0 = arith.constant 0 : i32
    return %arg0, %c0_i32 : i32, i32
  }
  func.func @transform_1(%arg0: i32) -> (i32, i32) {
    %c0_i32 = arith.constant 0 : i32
    %c0_i32_0 = arith.constant 0 : i32
    %c0_i32_1 = arith.constant 0 : i32
    return %c0_i32, %c0_i32_0 : i32, i32
  }
  func.func @transform_2(%arg0: i32) -> (i32, i32) {
    %c0_i32 = arith.constant 0 : i32
    %c0_i32_0 = arith.constant 0 : i32
    %c0_i32_1 = arith.constant 0 : i32
    return %c0_i32, %c0_i32_0 : i32, i32
  }
  func.func @transform_3(%arg0: i32) -> (i32, i32) {
    %c0_i32 = arith.constant 0 : i32
    %c0_i32_0 = arith.constant 0 : i32
    return %arg0, %c0_i32 : i32, i32
  }
}

</mosaic_0001>

<llo_original>
// kernel: tpu_custom_call.1
$region0: #{tpu_custom_call.1}
  #allocation0 [shape = 'u32[]', space=smem, size = 0x4, offset = 0x4, fixed_abs, tag = 'smem constant byte address 0x4 - core index']
  #allocation1 [shape = 'u32[72,128]{1,0:T(1,128)}', space=vmem, size = 0x9000, scoped, tag = 'internal scratch']
  %s0 = inlined_call_operand.hbm [shape: f32[8,128], index: 0, kind: input, shape index: {}]
  %s1 = inlined_call_operand.hbm [shape: f32[128,128], index: 1, kind: input, shape index: {}]
  %s2 = inlined_call_operand.vmem [shape: f32[1,128], index: 2, kind: input, shape index: {}]
  %s3 = inlined_call_operand.hbm [shape: f32[8,128], index: 3, kind: output, shape index: {}]
  %s4 = sld [smem:[#allocation0]]
  $region30: #{tpu_custom_call.1} parent=0
    _
  %s6 = ssub.s32 1, %s4
  %s7 = scalar_select 0, %s6, %s4
  $region1: #{tpu_custom_call.1} parent=0
    #allocation2 [shape = 'u8[4096]{0}', space=vmem, size = 0x1000, scoped, tag = 'input window, operand 0, single buffered']
    #allocation3 [shape = 's32[1]{0}', space=sflag, size = 0x4, scoped, tag = 'scoped memory for tpu_custom_call.1']
    #allocation4 [shape = 's32[1]{0}', space=sflag, size = 0x4, scoped, tag = 'scoped memory for tpu_custom_call.1']
    #allocation5 [shape = 'u8[65536]{0}', space=vmem, size = 0x10000, scoped, tag = 'input window, operand 1, single buffered']
    #allocation6 [shape = 's32[1]{0}', space=sflag, size = 0x4, scoped, tag = 'scoped memory for tpu_custom_call.1']
    #allocation7 [shape = 'u8[4096]{0}', space=vmem, size = 0x1000, scoped, tag = 'output window, operand 0, single buffered']
    %8 = vsyncpa [#allocation3], 0
    %9 = vsyncpa [#allocation6], 0
    %10 = vsyncpa [#allocation4], 0
    // Predicated region
    $region2: #{tpu_custom_call.1} parent=1 // pred_check
      _
    $region3: #{tpu_custom_call.1} parent=1 // pred_check_branch
      %12 = sbr.rel (0) target = $region5
    $region4: #{tpu_custom_call.1} parent=1 // pred_region
      %14 = vsyncadd [#allocation3], 0
      %s16 = sshll.u32 %s0, 4
      %s17 = int_to_ptr.hbm [resolvable:$true] %s16
      %s18 = sshll.u32 [#allocation2], 4
      %s19 = int_to_ptr.vmem [resolvable:$true] %s18
      %21 = dma.hbm_to_vmem [thread:$0]  %s17, 128, %s19, [#allocation3]
    $region5: #{tpu_custom_call.1} parent=1 // pred_fallthru
      _
    // Predicated region
    $region6: #{tpu_custom_call.1} parent=1 // pred_check
      _
    $region7: #{tpu_custom_call.1} parent=1 // pred_check_branch
      %23 = sbr.rel (0) target = $region9
    $region8: #{tpu_custom_call.1} parent=1 // pred_region
      %25 = vsyncadd [#allocation6], 0
      %s26 = sshll.u32 %s1, 4
      %s27 = int_to_ptr.hbm [resolvable:$true] %s26
      %s28 = sshll.u32 [#allocation5], 4
      %s29 = int_to_ptr.vmem [resolvable:$true] %s28
      %34 = dma.hbm_to_vmem [thread:$0]  %s27, 2048, %s29, [#allocation6], 128, 128, 8
    $region9: #{tpu_custom_call.1} parent=1 // pred_fallthru
      _
    // Predicated region
    $region10: #{tpu_custom_call.1} parent=1 // pred_check
      _
    $region11: #{tpu_custom_call.1} parent=1 // pred_check_branch
      %36 = sbr.rel (0) target = $region13
    $region12: #{tpu_custom_call.1} parent=1 // pred_region
      _
    $region13: #{tpu_custom_call.1} parent=1 // pred_fallthru
      _
    // Predicated region
    $region14: #{tpu_custom_call.1} parent=1 // pred_check
      _
    $region15: #{tpu_custom_call.1} parent=1 // pred_check_branch
      %38 = sbr.rel (0) target = $region17
    $region16: #{tpu_custom_call.1} parent=1 // pred_region
      %40 = dma.done [#allocation3], 128
    $region17: #{tpu_custom_call.1} parent=1 // pred_fallthru
      _
    // Predicated region
    $region18: #{tpu_custom_call.1} parent=1 // pred_check
      _
    $region19: #{tpu_custom_call.1} parent=1 // pred_check_branch
      %42 = sbr.rel (0) target = $region21
    $region20: #{tpu_custom_call.1} parent=1 // pred_region
      %44 = dma.done [#allocation6], 2048
    $region21: #{tpu_custom_call.1} parent=1 // pred_fallthru
      _
    %v45 = vld [vmem:[#allocation2] sm:$0xff]
    %v46 = vld [vmem:[#allocation5] sm:$0xff]
    %v47 = vld [vmem:[#allocation5 + $0x8] sm:$0xff]
    %v48 = vld [vmem:[#allocation5 + $0x10] sm:$0xff]
    %v49 = vld [vmem:[#allocation5 + $0x18] sm:$0xff]
    %v50 = vld [vmem:[#allocation5 + $0x20] sm:$0xff]
    %v51 = vld [vmem:[#allocation5 + $0x28] sm:$0xff]
    %v52 = vld [vmem:[#allocation5 + $0x30] sm:$0xff]
    %v53 = vld [vmem:[#allocation5 + $0x38] sm:$0xff]
    %v54 = vld [vmem:[#allocation5 + $0x40] sm:$0xff]
    %v55 = vld [vmem:[#allocation5 + $0x48] sm:$0xff]
    %v56 = vld [vmem:[#allocation5 + $0x50] sm:$0xff]
    %v57 = vld [vmem:[#allocation5 + $0x58] sm:$0xff]
    %v58 = vld [vmem:[#allocation5 + $0x60] sm:$0xff]
    %v59 = vld [vmem:[#allocation5 + $0x68] sm:$0xff]
    %v60 = vld [vmem:[#allocation5 + $0x70] sm:$0xff]
    %v61 = vld [vmem:[#allocation5 + $0x78] sm:$0xff]
    %v62 = vld [vmem:[%s2] sm:$0x1]
    %v64 = vperm.slane %v62, 0
    %66 = vmatpush.msra.mxu0 %v61
    %67 = vmatpush.msra.mxu0 %v60
    %68 = vmatpush.msra.mxu0 %v59
    %69 = vmatpush.msra.mxu0 %v58
    %70 = vmatpush.msra.mxu0 %v57
    %71 = vmatpush.msra.mxu0 %v56
    %72 = vmatpush.msra.mxu0 %v55
    %73 = vmatpush.msra.mxu0 %v54
    %74 = vmatpush.msra.mxu0 %v53
    %75 = vmatpush.msra.mxu0 %v52
    %76 = vmatpush.msra.mxu0 %v51
    %77 = vmatpush.msra.mxu0 %v50
    %78 = vmatpush.msra.mxu0 %v49
    %79 = vmatpush.msra.mxu0 %v48
    %80 = vmatpush.msra.mxu0 %v47
    %81 = vmatpush.msra.mxu0 %v46
    %82 = vmatmul.f32.gmra.mxu0 %v45
    %v83 = vpop.f32.mrf.mxu0
    %v84 = vadd.f32 %v64, %v83
    %85 = vdwg.mxu0
    %86 = vst [vmem:[#allocation7] sm:$0xff] %v84
    // Predicated region
    $region22: #{tpu_custom_call.1} parent=1 // pred_check
      _
    $region23: #{tpu_custom_call.1} parent=1 // pred_check_branch
      %88 = sbr.rel (0) target = $region25
    $region24: #{tpu_custom_call.1} parent=1 // pred_region
      %90 = vsyncadd [#allocation4], 0
      %s92 = sshll.u32 [#allocation7], 4
      %s93 = int_to_ptr.vmem [resolvable:$true] %s92
      %s94 = sshll.u32 %s3, 4
      %s95 = int_to_ptr.hbm [resolvable:$true] %s94
      %97 = dma.vmem_to_hbm [thread:$0]  %s93, 128, %s95, [#allocation4]
    $region25: #{tpu_custom_call.1} parent=1 // pred_fallthru
      _
    // Predicated region
    $region26: #{tpu_custom_call.1} parent=1 // pred_check
      _
    $region27: #{tpu_custom_call.1} parent=1 // pred_check_branch
      %99 = sbr.rel (0) target = $region29
    $region28: #{tpu_custom_call.1} parent=1 // pred_region
      %101 = dma.done [#allocation4], 128
    $region29: #{tpu_custom_call.1} parent=1 // pred_fallthru
      _
    %102 = vsyncpa [#allocation3], 1
    %103 = vsyncpa [#allocation6], 1
    %104 = vsyncpa [#allocation4], 1

</llo_original>
